<compile_context>
chip_gen: v5e
topology: v5e:2x2
jax: 0.10.0
libtpu: 0.0.40
codegen_flags: <defaults>
</compile_context>

<pallas_src>
import functools

import jax
import jax.numpy as jnp
from jax import lax
from jax.experimental import pallas as pl
from jax.experimental.pallas import tpu as pltpu


def _round_up(x: int, m: int) -> int:
    return ((x + m - 1) // m) * m


def _pick_tile_d(d_pad128: int, L: int, itemsize: int,
                 w_budget_bytes: int = 8 * 1024 * 1024) -> int:
    """Largest 128-multiple weight-column tile under the VMEM budget.

    At realistic sizes (L <= 720, d_model <= 1024) this returns d_pad128, i.e.
    the whole weight stays resident in VMEM for the entire kernel.
    """
    if L * d_pad128 * itemsize <= w_budget_bytes:
        return d_pad128
    cols = (w_budget_bytes // (L * itemsize)) // 128 * 128
    return int(max(128, min(cols, d_pad128)))


def _pick_tb(B: int, L: int, N: int, M: int, V: int, tile_d: int, itemsize: int,
             budget_bytes: int = 20 * 1024 * 1024) -> int:
    """Batch-block size: big enough for healthy DMA payloads, small enough for VMEM."""
    per_batch = 2 * itemsize * (L * (N + M) + V * tile_d)   # double-buffered in/out rows
    fixed = 2 * itemsize * (L * tile_d + tile_d)            # weight + bias buffers
    avail = budget_bytes - fixed
    tb = max(1, min(B, avail // per_batch)) if avail > per_batch else 1
    # Keep >= 2 grid steps whenever B > 1 (v7x has two TensorCores per chip).
    if B > 1:
        tb = min(tb, max(1, (B + 1) // 2))
    # Uniform blocks only (avoid partial batch blocks).
    tb = int(tb)
    while B % tb != 0:
        tb -= 1
    return tb


def _embed_kernel_with_mark(x_ref, m_ref, w_ref, b_ref, o_ref, *, tb: int):
    # x_ref: [TB, L, N]   native layout (no HBM transpose)
    # m_ref: [TB, L, M]
    # w_ref: [L, TILE_D]  (nn.Linear weight, transposed + zero-padded, x.dtype)
    # b_ref: [1, TILE_D]  (f32, zero-padded)
    # o_ref: [TB, V, TILE_D]
    w = w_ref[...]
    b = b_ref[...].astype(jnp.float32)
    # TODO(synk): if a Mosaic dump shows an explicit per-step XLU relayout for the
    # transposed-LHS dot, fold TB*V into the matmul M dim instead (v5e MXU fill).
    for t in range(tb):
        # Concat x / x_mark on the lane axis in VMEM -> one dot, one dense store.
        xm = jnp.concatenate([x_ref[t], m_ref[t]], axis=1)          # [L, V]
        acc = lax.dot_general(xm, w, (((0,), (0,)), ((), ())),
                              preferred_element_type=jnp.float32)    # [V, TILE_D]
        o_ref[t] = (acc + b).astype(o_ref.dtype)


def _embed_kernel_no_mark(x_ref, w_ref, b_ref, o_ref, *, tb: int):
    w = w_ref[...]
    b = b_ref[...].astype(jnp.float32)
    for t in range(tb):
        acc = lax.dot_general(x_ref[t], w, (((0,), (0,)), ((), ())),
                              preferred_element_type=jnp.float32)
        o_ref[t] = (acc + b).astype(o_ref.dtype)


def data_embedding_inverted(x, x_mark, weight, bias):
    """Forward pass of DataEmbedding_inverted (dropout in eval mode = identity).

    x:      [B, L, N]
    x_mark: [B, L, M] or None
    weight: [d_model, L]   (PyTorch nn.Linear layout)
    bias:   [d_model]
    returns [B, N(+M), d_model]
    """
    B, L, N = x.shape
    d_model = weight.shape[0]
    M = 0 if x_mark is None else x_mark.shape[2]
    V = N + M
    dtype = x.dtype
    itemsize = jnp.dtype(dtype).itemsize

    # Weight tiling: keep the whole padded weight resident when possible.
    d_pad128 = _round_up(d_model, 128)
    tile_d = _pick_tile_d(d_pad128, L, itemsize)
    d_grid = pl.cdiv(d_model, tile_d)
    d_tot = d_grid * tile_d

    # nn.Linear weight [d_model, L] -> [L, d_tot] in x.dtype (bf16 x => bf16 MXU path).
    w_t = jnp.transpose(weight).astype(dtype)
    bias_f32 = bias.astype(jnp.float32)
    if d_tot != d_model:
        w_t = jnp.pad(w_t, ((0, 0), (0, d_tot - d_model)))
        bias_f32 = jnp.pad(bias_f32, (0, d_tot - d_model))
    b2 = bias_f32.reshape(1, d_tot)

    # Batch blocking.
    tb = _pick_tb(B, L, N, M, V, tile_d, itemsize)
    b_grid = B // tb

    # Grid: d-tile OUTER, batch INNER -> weight block never re-fetched inside the
    # batch sweep (and in the common d_grid==1 case it is fetched exactly once).
    grid = (d_grid, b_grid)
    x_spec = pl.BlockSpec((tb, L, N), lambda j, i: (i, 0, 0))
    w_spec = pl.BlockSpec((L, tile_d), lambda j, i: (0, j))
    bias_spec = pl.BlockSpec((1, tile_d), lambda j, i: (0, j))
    # Output keeps the true d_model; a partial last d-tile is masked by Pallas,
    # so no wrapper-side un-pad slice (no extra HBM read/write of the output).
    out_spec = pl.BlockSpec((tb, V, tile_d), lambda j, i: (i, 0, j))
    out_shape = jax.ShapeDtypeStruct((B, V, d_model), dtype)

    compiler_params = pltpu.CompilerParams(
        dimension_semantics=("parallel", "parallel"))
    cost = pl.CostEstimate(
        flops=2 * B * V * L * d_tot,
        transcendentals=0,
        bytes_accessed=itemsize * (B * L * V + L * d_tot + B * V * d_model) + 4 * d_tot,
    )

    if x_mark is None:
        out = pl.pallas_call(
            functools.partial(_embed_kernel_no_mark, tb=tb),
            out_shape=out_shape,
            grid=grid,
            in_specs=[x_spec, w_spec, bias_spec],
            out_specs=out_spec,
            compiler_params=compiler_params,
            cost_estimate=cost,
        )(x, w_t, b2)
    else:
        x_mark = x_mark.astype(dtype)  # normalize dtypes (matches PyTorch promotion intent)
        m_spec = pl.BlockSpec((tb, L, M), lambda j, i: (i, 0, 0))
        out = pl.pallas_call(
            functools.partial(_embed_kernel_with_mark, tb=tb),
            out_shape=out_shape,
            grid=grid,
            in_specs=[x_spec, m_spec, w_spec, bias_spec],
            out_specs=out_spec,
            compiler_params=compiler_params,
            cost_estimate=cost,
        )(x, x_mark, w_t, b2)

    # TODO(synk): dropout omitted (module evaluated in inference mode -> identity).
    return out


def _reference(x, x_mark, weight, bias):
    xt = jnp.transpose(x, (0, 2, 1))
    if x_mark is not None:
        xt = jnp.concatenate([xt, jnp.transpose(x_mark, (0, 2, 1))], axis=1)
    return xt @ weight.T + bias


if __name__ == "__main__":
    key = jax.random.PRNGKey(0)

    # --- Test 1: small shapes, d_model not 128-aligned (partial d-tile path) ---
    B, L, N, M, d_model = 2, 8, 4, 3, 32
    k1, k2, k3, k4, key = jax.random.split(key, 5)
    x = jax.random.normal(k1, (B, L, N), dtype=jnp.float32)
    x_mark = jax.random.normal(k2, (B, L, M), dtype=jnp.float32)
    bound = 1.0 / (L ** 0.5)
    weight = jax.random.uniform(k3, (d_model, L), minval=-bound, maxval=bound, dtype=jnp.float32)
    bias = jax.random.uniform(k4, (d_model,), minval=-bound, maxval=bound, dtype=jnp.float32)

    out = jax.block_until_ready(data_embedding_inverted(x, x_mark, weight, bias))
    ref = _reference(x, x_mark, weight, bias)
    assert out.shape == (B, N + M, d_model)
    assert jnp.allclose(out, ref, atol=1e-5, rtol=1e-5)

    # x_mark = None branch.
    out_none = jax.block_until_ready(data_embedding_inverted(x, None, weight, bias))
    ref_none = _reference(x, None, weight, bias)
    assert out_none.shape == (B, N, d_model)
    assert jnp.allclose(out_none, ref_none, atol=1e-5, rtol=1e-5)

    # --- Test 2: d_model = 640 (previously forced lane-thin 128 tiles; now one resident tile) ---
    B2, L2, N2, M2, d_model2 = 2, 16, 6, 3, 640
    k1, k2, k3, k4, key = jax.random.split(key, 5)
    x2 = jax.random.normal(k1, (B2, L2, N2), dtype=jnp.float32)
    x_mark2 = jax.random.normal(k2, (B2, L2, M2), dtype=jnp.float32)
    bound2 = 1.0 / (L2 ** 0.5)
    weight2 = jax.random.uniform(k3, (d_model2, L2), minval=-bound2, maxval=bound2, dtype=jnp.float32)
    bias2 = jax.random.uniform(k4, (d_model2,), minval=-bound2, maxval=bound2, dtype=jnp.float32)

    out2 = jax.block_until_ready(data_embedding_inverted(x2, x_mark2, weight2, bias2))
    ref2 = _reference(x2, x_mark2, weight2, bias2)
    assert out2.shape == (B2, N2 + M2, d_model2)
    assert jnp.allclose(out2, ref2, atol=1e-5, rtol=1e-5)

    # --- Test 3: larger batch, exercises batch-blocking (TB > 1) ---
    B3, L3, N3, M3, d_model3 = 8, 24, 5, 4, 256
    k1, k2, k3, k4, key = jax.random.split(key, 5)
    x3 = jax.random.normal(k1, (B3, L3, N3), dtype=jnp.float32)
    x_mark3 = jax.random.normal(k2, (B3, L3, M3), dtype=jnp.float32)
    bound3 = 1.0 / (L3 ** 0.5)
    weight3 = jax.random.uniform(k3, (d_model3, L3), minval=-bound3, maxval=bound3, dtype=jnp.float32)
    bias3 = jax.random.uniform(k4, (d_model3,), minval=-bound3, maxval=bound3, dtype=jnp.float32)

    out3 = jax.block_until_ready(data_embedding_inverted(x3, x_mark3, weight3, bias3))
    ref3 = _reference(x3, x_mark3, weight3, bias3)
    assert out3.shape == (B3, N3 + M3, d_model3)
    assert jnp.allclose(out3, ref3, atol=1e-5, rtol=1e-5)

    print("KERNEL_OK")
</pallas_src>

<mosaic_0001>
module attributes {stable_mosaic.version = 11 : i64} {
  func.func @_embed_kernel_with_mark(%arg0: i32, %arg1: i32, %arg2: memref<1x8x4xf32, #tpu.memory_space<vmem>>, %arg3: memref<1x8x3xf32, #tpu.memory_space<vmem>>, %arg4: memref<8x128xf32, #tpu.memory_space<vmem>>, %arg5: memref<1x128xf32, #tpu.memory_space<vmem>>, %arg6: memref<1x7x128xf32, #tpu.memory_space<vmem>>) attributes {dimension_semantics = [#tpu.dimension_semantics<parallel>, #tpu.dimension_semantics<parallel>], iteration_bounds = array<i64: 1, 2>, scalar_prefetch = 0 : i64, scratch_operands = 0 : i64, tpu.core_type = #tpu.core_type<tc>, window_params = [{transform_indices = @transform_0, window_bounds = array<i64: 1, 8, 4>}, {transform_indices = @transform_1, window_bounds = array<i64: 1, 8, 3>}, {transform_indices = @transform_2, window_bounds = array<i64: 8, 128>}, {transform_indices = @transform_3, window_bounds = array<i64: 1, 128>}, {transform_indices = @transform_4, window_bounds = array<i64: 1, 7, 128>}]} {
    %c0 = arith.constant 0 : index
    %c0_0 = arith.constant 0 : index
    %0 = vector.load %arg4[%c0, %c0_0] : memref<8x128xf32, #tpu.memory_space<vmem>>, vector<8x128xf32>
    %c0_1 = arith.constant 0 : index
    %c0_2 = arith.constant 0 : index
    %1 = vector.load %arg5[%c0_1, %c0_2] : memref<1x128xf32, #tpu.memory_space<vmem>>, vector<1x128xf32>
    %c0_3 = arith.constant 0 : index
    %c0_4 = arith.constant 0 : index
    %c0_5 = arith.constant 0 : index
    %2 = vector.load %arg2[%c0_3, %c0_4, %c0_5] : memref<1x8x4xf32, #tpu.memory_space<vmem>>, vector<1x8x4xf32>
    %3 = vector.shape_cast %2 : vector<1x8x4xf32> to vector<8x4xf32>
    %c0_6 = arith.constant 0 : index
    %c0_7 = arith.constant 0 : index
    %c0_8 = arith.constant 0 : index
    %4 = vector.load %arg3[%c0_6, %c0_7, %c0_8] : memref<1x8x3xf32, #tpu.memory_space<vmem>>, vector<1x8x3xf32>
    %5 = vector.shape_cast %4 : vector<1x8x3xf32> to vector<8x3xf32>
    %6 = tpu.concatenate %3, %5 in 1 : vector<8x4xf32>, vector<8x3xf32> -> vector<8x7xf32>
    %cst = arith.constant dense<0.000000e+00> : vector<7x128xf32>
    %7 = tpu.matmul %6, %0, %cst {dimension_numbers = #tpu.dot_dimension_numbers<[0], [0], [1], [1], [0, 1, 1, 1], [], []>} : vector<8x7xf32>, vector<8x128xf32>, vector<7x128xf32> -> vector<7x128xf32>
    %8 = vector.broadcast %1 : vector<1x128xf32> to vector<7x128xf32>
    %9 = arith.addf %7, %8 : vector<7x128xf32>
    %c0_9 = arith.constant 0 : index
    %c0_10 = arith.constant 0 : index
    %c0_11 = arith.constant 0 : index
    %10 = vector.load %arg6[%c0_9, %c0_10, %c0_11] : memref<1x7x128xf32, #tpu.memory_space<vmem>>, vector<1x7x128xf32>
    %11 = vector.shape_cast %10 : vector<1x7x128xf32> to vector<7x128xf32>
    %12 = vector.shape_cast %9 : vector<7x128xf32> to vector<1x7x128xf32>
    tpu.vector_store %arg6[%c0_9, %c0_10, %c0_11], %12 {strides = array<i32>} : memref<1x7x128xf32, #tpu.memory_space<vmem>>, vector<1x7x128xf32>,
    return
  }
  func.func @transform_0(%arg0: i32, %arg1: i32) -> (i32, i32, i32) {
    %c0_i32 = arith.constant 0 : i32
    %c0_i32_0 = arith.constant 0 : i32
    %c0_i32_1 = arith.constant 0 : i32
    return %arg1, %c0_i32, %c0_i32_0 : i32, i32, i32
  }
  func.func @transform_1(%arg0: i32, %arg1: i32) -> (i32, i32, i32) {
    %c0_i32 = arith.constant 0 : i32
    %c0_i32_0 = arith.constant 0 : i32
    %c0_i32_1 = arith.constant 0 : i32
    return %arg1, %c0_i32, %c0_i32_0 : i32, i32, i32
  }
  func.func @transform_2(%arg0: i32, %arg1: i32) -> (i32, i32) {
    %c0_i32 = arith.constant 0 : i32
    %c0_i32_0 = arith.constant 0 : i32
    return %c0_i32, %arg0 : i32, i32
  }
  func.func @transform_3(%arg0: i32, %arg1: i32) -> (i32, i32) {
    %c0_i32 = arith.constant 0 : i32
    %c0_i32_0 = arith.constant 0 : i32
    return %c0_i32, %arg0 : i32, i32
  }
  func.func @transform_4(%arg0: i32, %arg1: i32) -> (i32, i32, i32) {
    %c0_i32 = arith.constant 0 : i32
    %c0_i32_0 = arith.constant 0 : i32
    return %arg1, %c0_i32, %arg0 : i32, i32, i32
  }
}

</mosaic_0001>

<llo_original>
// kernel: tpu_custom_call.1
$region0: #{tpu_custom_call.1}
  #allocation0 [shape = 'u32[]', space=smem, size = 0x4, offset = 0x4, fixed_abs, tag = 'smem constant byte address 0x4 - core index']
  #allocation1 [shape = 'u32[72,128]{1,0:T(1,128)}', space=vmem, size = 0x9000, scoped, tag = 'internal scratch']
  %s0 = inlined_call_operand.vmem [shape: f32[2,8,4], index: 0, kind: input, shape index: {}]
  %s1 = inlined_call_operand.vmem [shape: f32[2,8,3], index: 1, kind: input, shape index: {}]
  %s2 = inlined_call_operand.vmem [shape: f32[8,128], index: 2, kind: input, shape index: {}]
  %s3 = inlined_call_operand.vmem [shape: f32[1,128], index: 3, kind: input, shape index: {}]
  %s4 = inlined_call_operand.vmem [shape: f32[2,7,32], index: 4, kind: output, shape index: {}]
  %s5 = sld [smem:[#allocation0]]
  $region49: #{tpu_custom_call.1} parent=0
    _
  %s7 = ssub.s32 1, %s5
  %s8 = scalar_select 0, %s7, %s5
  loop: start=0, step=1, limit=4
  $region2: #{tpu_custom_call.1} parent=0 // loop_pre_header
    _
  $region3: #{tpu_custom_call.1} parent=0 // loop_header
    %s10 = sphi 0, %s14
    %p11 = scmp.ge.s32.totalorder %s10, 4
    %s17 = sphi 0, %s29
    %s18 = sphi 0, %s25
    %s19 = sphi 0, %s17
    %s20 = sphi 0, %s18
    %s21 = sphi 0, %s19
    %s22 = sphi 0, %s20
    %s32 = sphi 0, %s34
    %s35 = sphi 0, %s32
    %s36 = sphi 0, %s35
    %s52 = sphi 0, %s36
    %s58 = sphi 0, %s60
    %s61 = sphi 0, %s58
    %s62 = sphi 0, %s61
    %s78 = sphi 0, %s62
    %s84 = sphi 0, %s86
    %s87 = sphi 0, %s84
    %s88 = sphi 0, %s87
    %s104 = sphi 0, %s88
    %s110 = sphi 0, %s112
    %s113 = sphi 0, %s110
    %s114 = sphi 0, %s113
    %s130 = sphi 0, %s114
    %s138 = sphi 0, %s140
    %s141 = sphi 0, %s138
    %s142 = sphi 0, %s141
    %s158 = sphi 0, %s142
  $region4: #{tpu_custom_call.1} parent=0 // loop_header_branch
    %13 = sbr.rel (%p11) target = $region8
  $region5: #{tpu_custom_call.1} parent=0 // loop_body
    %s15 = ssub.s32 %s10, 1
    %s16 = ssub.s32 %s10, 2
    %s23 = sadd.s32 1, %s18
    %p24 = scmp.ge.s32.totalorder %s23, 2
    %s25 = scalar_select %p24, 0, %s23
    %s26 = sadd.s32 1, %s17
    %s27 = scalar_select %p24, %s26, %s17
    %p28 = scmp.ge.s32.totalorder %s27, 1
    %s29 = scalar_select %p28, 0, %s27
    %s30 = ssub.s32 %s18, %s25
    %p31 = scmp.eq.s32.totalorder %s30, 0
    %s33 = sadd.s32 %s32, 1
    %s34 = scalar_select %p31, %s32, %s33
    %p37 = pneg %p31
    %p38 = scmp.eq.s32.totalorder %s10, 1
    %p39 = por %p37, %p38
    %p40 = scmp.ne.s32.totalorder %s32, %s35
    %p41 = scmp.eq.s32.totalorder %s10, 0
    %p42 = por %p40, %p41
    %p43 = scmp.ne.s32.totalorder %s32, %s35
    %p44 = scmp.eq.s32.totalorder %s15, 1
    %p45 = por %p43, %p44
    %p46 = scmp.ne.s32.totalorder %s35, %s36
    %p47 = scmp.eq.s32.totalorder %s15, 0
    %p48 = por %p46, %p47
    %p49 = scmp.ne.s32.totalorder %s35, %s36
    %p50 = scmp.eq.s32.totalorder %s16, 1
    %p51 = por %p49, %p50
    %p53 = scmp.ne.s32.totalorder %s36, %s52
    %p54 = scmp.eq.s32.totalorder %s16, 0
    %p55 = por %p53, %p54
    %s56 = ssub.s32 %s18, %s25
    %p57 = scmp.eq.s32.totalorder %s56, 0
    %s59 = sadd.s32 %s58, 1
    %s60 = scalar_select %p57, %s58, %s59
    %p63 = pneg %p57
    %p64 = scmp.eq.s32.totalorder %s10, 1
    %p65 = por %p63, %p64
    %p66 = scmp.ne.s32.totalorder %s58, %s61
    %p67 = scmp.eq.s32.totalorder %s10, 0
    %p68 = por %p66, %p67
    %p69 = scmp.ne.s32.totalorder %s58, %s61
    %p70 = scmp.eq.s32.totalorder %s15, 1
    %p71 = por %p69, %p70
    %p72 = scmp.ne.s32.totalorder %s61, %s62
    %p73 = scmp.eq.s32.totalorder %s15, 0
    %p74 = por %p72, %p73
    %p75 = scmp.ne.s32.totalorder %s61, %s62
    %p76 = scmp.eq.s32.totalorder %s16, 1
    %p77 = por %p75, %p76
    %p79 = scmp.ne.s32.totalorder %s62, %s78
    %p80 = scmp.eq.s32.totalorder %s16, 0
    %p81 = por %p79, %p80
    %s82 = ssub.s32 %s17, %s29
    %p83 = scmp.eq.s32.totalorder %s82, 0
    %s85 = sadd.s32 %s84, 1
    %s86 = scalar_select %p83, %s84, %s85
    %p89 = pneg %p83
    %p90 = scmp.eq.s32.totalorder %s10, 1
    %p91 = por %p89, %p90
    %p92 = scmp.ne.s32.totalorder %s84, %s87
    %p93 = scmp.eq.s32.totalorder %s10, 0
    %p94 = por %p92, %p93
    %p95 = scmp.ne.s32.totalorder %s84, %s87
    %p96 = scmp.eq.s32.totalorder %s15, 1
    %p97 = por %p95, %p96
    %p98 = scmp.ne.s32.totalorder %s87, %s88
    %p99 = scmp.eq.s32.totalorder %s15, 0
    %p100 = por %p98, %p99
    %p101 = scmp.ne.s32.totalorder %s87, %s88
    %p102 = scmp.eq.s32.totalorder %s16, 1
    %p103 = por %p101, %p102
    %p105 = scmp.ne.s32.totalorder %s88, %s104
    %p106 = scmp.eq.s32.totalorder %s16, 0
    %p107 = por %p105, %p106
    %s108 = ssub.s32 %s17, %s29
    %p109 = scmp.eq.s32.totalorder %s108, 0
    %s111 = sadd.s32 %s110, 1
    %s112 = scalar_select %p109, %s110, %s111
    %p115 = pneg %p109
    %p116 = scmp.eq.s32.totalorder %s10, 1
    %p117 = por %p115, %p116
    %p118 = scmp.ne.s32.totalorder %s110, %s113
    %p119 = scmp.eq.s32.totalorder %s10, 0
    %p120 = por %p118, %p119
    %p121 = scmp.ne.s32.totalorder %s110, %s113
    %p122 = scmp.eq.s32.totalorder %s15, 1
    %p123 = por %p121, %p122
    %p124 = scmp.ne.s32.totalorder %s113, %s114
    %p125 = scmp.eq.s32.totalorder %s15, 0
    %p126 = por %p124, %p125
    %p127 = scmp.ne.s32.totalorder %s113, %s114
    %p128 = scmp.eq.s32.totalorder %s16, 1
    %p129 = por %p127, %p128
    %p131 = scmp.ne.s32.totalorder %s114, %s130
    %p132 = scmp.eq.s32.totalorder %s16, 0
    %p133 = por %p131, %p132
    %s134 = ssub.s32 %s18, %s25
    %s135 = ssub.s32 %s17, %s29
    %s136 = sor.u32 %s134, %s135
    %p137 = scmp.eq.s32.totalorder %s136, 0
    %s139 = sadd.s32 %s138, 1
    %s140 = scalar_select %p137, %s138, %s139
    %p143 = pneg %p137
    %p144 = scmp.eq.s32.totalorder %s10, 1
    %p145 = por %p143, %p144
    %p146 = scmp.ne.s32.totalorder %s138, %s141
    %p147 = scmp.eq.s32.totalorder %s10, 0
    %p148 = por %p146, %p147
    %p149 = scmp.ne.s32.totalorder %s138, %s141
    %p150 = scmp.eq.s32.totalorder %s15, 1
    %p151 = por %p149, %p150
    %p152 = scmp.ne.s32.totalorder %s141, %s142
    %p153 = scmp.eq.s32.totalorder %s15, 0
    %p154 = por %p152, %p153
    %p155 = scmp.ne.s32.totalorder %s141, %s142
    %p156 = scmp.eq.s32.totalorder %s16, 1
    %p157 = por %p155, %p156
    %p159 = scmp.ne.s32.totalorder %s142, %s158
    %p160 = scmp.eq.s32.totalorder %s16, 0
    %p161 = por %p159, %p160
    %p162 = scmp.le.s32.totalorder 1, %s10
    %p163 = scmp.lt.s32.totalorder %s10, 3
    %p164 = pnand %p162, %p163
    %p165 = pneg %p164
    // Predicated region
    $region9: #{tpu_custom_call.1} parent=5 // pred_check
      _
    $region10: #{tpu_custom_call.1} parent=5 // pred_check_branch
      %167 = sbr.rel (%p164) target = $region12
    $region11: #{tpu_custom_call.1} parent=5 // pred_region
      %s168 = ssub.s32 %s10, 1
      // Predicated region
      $region13: #{tpu_custom_call.1} parent=11 // pred_check
        %p169 = pneg %p100
      $region14: #{tpu_custom_call.1} parent=11 // pred_check_branch
        %171 = sbr.rel (%p169) target = $region16
      $region15: #{tpu_custom_call.1} parent=11 // pred_region
        %p172 = scmp.lt.s32.totalorder %s19, 0
        %s173 = scalar_select %p172, %s19, 0
        %s174 = smul.addr %s173, 8
        %s175 = scalar_lea.vmem %s2, %s174
      $region16: #{tpu_custom_call.1} parent=11 // pred_fallthru
        _
      // Predicated region
      $region17: #{tpu_custom_call.1} parent=11 // pred_check
        %p176 = pneg %p126
      $region18: #{tpu_custom_call.1} parent=11 // pred_check_branch
        %178 = sbr.rel (%p176) target = $region20
      $region19: #{tpu_custom_call.1} parent=11 // pred_region
        %p179 = scmp.lt.s32.totalorder %s19, 0
        %s180 = scalar_select %p179, %s19, 0
        %s181 = scalar_lea.vmem %s3, %s180
      $region20: #{tpu_custom_call.1} parent=11 // pred_fallthru
        _
    $region12: #{tpu_custom_call.1} parent=5 // pred_fallthru
      _
    %p182 = scmp.lt.s32.totalorder %s10, 2
    // Predicated region
    $region21: #{tpu_custom_call.1} parent=5 // pred_check
      %p183 = pneg %p182
    $region22: #{tpu_custom_call.1} parent=5 // pred_check_branch
      %185 = sbr.rel (%p183) target = $region24
    $region23: #{tpu_custom_call.1} parent=5 // pred_region
      // Predicated region
      $region25: #{tpu_custom_call.1} parent=23 // pred_check
        %p186 = pneg %p42
      $region26: #{tpu_custom_call.1} parent=23 // pred_check_branch
        %188 = sbr.rel (%p186) target = $region28
      $region27: #{tpu_custom_call.1} parent=23 // pred_region
        %p189 = scmp.lt.s32.totalorder %s18, 1
        %s190 = scalar_select %p189, %s18, 1
        %s191 = smul.addr %s190, 8
        %s192 = scalar_lea.vmem %s0, %s191
      $region28: #{tpu_custom_call.1} parent=23 // pred_fallthru
        _
      // Predicated region
      $region29: #{tpu_custom_call.1} parent=23 // pred_check
        %p193 = pneg %p68
      $region30: #{tpu_custom_call.1} parent=23 // pred_check_branch
        %195 = sbr.rel (%p193) target = $region32
      $region31: #{tpu_custom_call.1} parent=23 // pred_region
        %p196 = scmp.lt.s32.totalorder %s18, 1
        %s197 = scalar_select %p196, %s18, 1
        %s198 = smul.addr %s197, 8
        %s199 = scalar_lea.vmem %s1, %s198
      $region32: #{tpu_custom_call.1} parent=23 // pred_fallthru
        _
    $region24: #{tpu_custom_call.1} parent=5 // pred_fallthru
      _
    %p200 = scmp.le.s32.totalorder 1, %s10
    %p201 = scmp.lt.s32.totalorder %s10, 3
    %p202 = pnand %p200, %p201
    %p203 = pneg %p202
    // Predicated region
    $region33: #{tpu_custom_call.1} parent=5 // pred_check
      _
    $region34: #{tpu_custom_call.1} parent=5 // pred_check_branch
      %205 = sbr.rel (%p202) target = $region36
    $region35: #{tpu_custom_call.1} parent=5 // pred_region
      %s206 = ssub.s32 %s10, 1
      %p207 = scmp.lt.s32.totalorder %s20, 1
      %s208 = scalar_select %p207, %s20, 1
      %s209 = smul.addr %s208, 8
      %s210 = scalar_lea.vmem %s0, %s209
      %p211 = pneg %p48
      %p212 = pneg %p45
      %p213 = scmp.lt.s32.totalorder %s20, 1
      %s214 = scalar_select %p213, %s20, 1
      %s215 = smul.addr %s214, 8
      %s216 = scalar_lea.vmem %s1, %s215
      %p217 = pneg %p74
      %p218 = pneg %p71
      %p219 = scmp.lt.s32.totalorder %s19, 0
      %s220 = scalar_select %p219, %s19, 0
      %s221 = smul.addr %s220, 8
      %s222 = scalar_lea.vmem %s2, %s221
      %p223 = pneg %p100
      %p224 = pneg %p97
      %p225 = scmp.lt.s32.totalorder %s19, 0
      %s226 = scalar_select %p225, %s19, 0
      %s227 = scalar_lea.vmem %s3, %s226
      %p228 = pneg %p126
      %p229 = pneg %p123
      %p230 = pneg %p154
      %p231 = pneg %p151
      %p232 = scmp.lt.s32.totalorder %s20, 1
      %s233 = scalar_select %p232, %s20, 1
      %p234 = scmp.lt.s32.totalorder %s19, 0
      %s235 = scalar_select %p234, %s19, 0
      %s236 = sadd.s32 %s235, %s233
      %s237 = smul.addr %s236, 8
      %s238 = scalar_lea.vmem %s4, %s237
      %p239 = scmp.lt.s32.totalorder %s20, 1
      %s240 = scalar_select %p239, %s20, 1
      %s241 = smul.addr %s240, 8
      %s242 = scalar_lea.vmem %s0, %s241
      %p243 = scmp.lt.s32.totalorder %s20, 1
      %s244 = scalar_select %p243, %s20, 1
      %s245 = smul.addr %s244, 8
      %s246 = scalar_lea.vmem %s1, %s245
      %p247 = scmp.lt.s32.totalorder %s19, 0
      %s248 = scalar_select %p247, %s19, 0
      %s249 = smul.addr %s248, 8
      %s250 = scalar_lea.vmem %s2, %s249
      %p251 = scmp.lt.s32.totalorder %s19, 0
      %s252 = scalar_select %p251, %s19, 0
      %s253 = scalar_lea.vmem %s3, %s252
      %p254 = scmp.lt.s32.totalorder %s20, 1
      %s255 = scalar_select %p254, %s20, 1
      %p256 = scmp.lt.s32.totalorder %s19, 0
      %s257 = scalar_select %p256, %s19, 0
      %s258 = sadd.s32 %s257, %s255
      %s259 = smul.addr %s258, 8
      %s260 = scalar_lea.vmem %s4, %s259
      %v261 = vld [vmem:[%s250] sm:$0xff]
      %v262 = vld [vmem:[%s253] sm:$0x1]
      %v263 = vld [vmem:[%s242] sm:$0xff]
      %v264 = vld [vmem:[%s246] sm:$0xff]
      %266 = vrot.lane.b32.xlu0 %v264, 4
      %v267 = vpop.permute.xlu0 %266
      %vm269 = vcmask 31744
      %v270 = vsel %vm269, %v263, %v267
      %v272 = vperm.slane %v262, 0
      %274 = vxpose.xlu0.b32.start [1/16] %v270, 128
      %275 = vxpose.xlu0.b32.cont [2/16] 0.0, 128
      %276 = vxpose.xlu0.b32.cont [3/16] 0.0, 128
      %277 = vxpose.xlu0.b32.cont [4/16] 0.0, 128
      %278 = vxpose.xlu0.b32.cont [5/16] 0.0, 128
      %279 = vxpose.xlu0.b32.cont [6/16] 0.0, 128
      %280 = vxpose.xlu0.b32.cont [7/16] 0.0, 128
      %281 = vxpose.xlu0.b32.cont [8/16] 0.0, 128
      %282 = vxpose.xlu0.b32.cont [9/16] 0.0, 128
      %283 = vxpose.xlu0.b32.cont [10/16] 0.0, 128
      %284 = vxpose.xlu0.b32.cont [11/16] 0.0, 128
      %285 = vxpose.xlu0.b32.cont [12/16] 0.0, 128
      %286 = vxpose.xlu0.b32.cont [13/16] 0.0, 128
      %287 = vxpose.xlu0.b32.cont [14/16] 0.0, 128
      %288 = vxpose.xlu0.b32.cont [15/16] 0.0, 128
      %289 = vxpose.xlu0.b32.end [16/16] 0.0, 128
      %v290 = vpop.trf.xlu0
      %v291 = vpop.trf.xlu0
      %v292 = vpop.trf.xlu0
      %v293 = vpop.trf.xlu0
      %v294 = vpop.trf.xlu0
      %v295 = vpop.trf.xlu0
      %v296 = vpop.trf.xlu0
      %v297 = vpop.trf.xlu0
      %v298 = vpop.trf.xlu0
      %v299 = vpop.trf.xlu0
      %v300 = vpop.trf.xlu0
      %v301 = vpop.trf.xlu0
      %v302 = vpop.trf.xlu0
      %v303 = vpop.trf.xlu0
      %v304 = vpop.trf.xlu0
      %v305 = vpop.trf.xlu0
      %vm306 = vcmask 64512
      %v308 = vsel %vm306, %v290, 0
      %310 = vmatpush.msra.mxu0 0.0
      %311 = vmatpush.msra.mxu0 0.0
      %312 = vmatpush.msra.mxu0 0.0
      %313 = vmatpush.msra.mxu0 0.0
      %314 = vmatpush.msra.mxu0 0.0
      %315 = vmatpush.msra.mxu0 0.0
      %316 = vmatpush.msra.mxu0 0.0
      %317 = vmatpush.msra.mxu0 0.0
      %318 = vmatpush.msra.mxu0 0.0
      %319 = vmatpush.msra.mxu0 0.0
      %320 = vmatpush.msra.mxu0 0.0
      %321 = vmatpush.msra.mxu0 0.0
      %322 = vmatpush.msra.mxu0 0.0
      %323 = vmatpush.msra.mxu0 0.0
      %324 = vmatpush.msra.mxu0 0.0
      %325 = vmatpush.msra.mxu0 %v261
      %326 = vmatmul.f32.gmra.mxu0 %v308
      %v327 = vpop.f32.mrf.mxu0
      %v328 = vadd.f32 %v272, %v327
      %329 = vdwg.mxu0
      %330 = vst [vmem:[%s260] sm:$0x7f] %v328
      %p331 = scmp.lt.s32.totalorder %s20, 1
      %s332 = scalar_select %p331, %s20, 1
      %p333 = scmp.lt.s32.totalorder %s19, 0
      %s334 = scalar_select %p333, %s19, 0
      %s335 = sadd.s32 %s334, %s332
      %s336 = smul.addr %s335, 8
      %s337 = scalar_lea.vmem %s4, %s336
      // Predicated region
      $region37: #{tpu_custom_call.1} parent=35 // pred_check
        %p338 = pneg %p151
      $region38: #{tpu_custom_call.1} parent=35 // pred_check_branch
        %340 = sbr.rel (%p338) target = $region40
      $region39: #{tpu_custom_call.1} parent=35 // pred_region
        _
      $region40: #{tpu_custom_call.1} parent=35 // pred_fallthru
        _
    $region36: #{tpu_custom_call.1} parent=5 // pred_fallthru
      _
    %p341 = scmp.le.s32.totalorder 2, %s10
    // Predicated region
    $region41: #{tpu_custom_call.1} parent=5 // pred_check
      %p342 = pneg %p341
    $region42: #{tpu_custom_call.1} parent=5 // pred_check_branch
      %344 = sbr.rel (%p342) target = $region44
    $region43: #{tpu_custom_call.1} parent=5 // pred_region
      %s345 = ssub.s32 %s10, 2
      // Predicated region
      $region45: #{tpu_custom_call.1} parent=43 // pred_check
        %p346 = pneg %p157
      $region46: #{tpu_custom_call.1} parent=43 // pred_check_branch
        %348 = sbr.rel (%p346) target = $region48
      $region47: #{tpu_custom_call.1} parent=43 // pred_region
        %p349 = scmp.lt.s32.totalorder %s22, 1
        %s350 = scalar_select %p349, %s22, 1
        %p351 = scmp.lt.s32.totalorder %s21, 0
        %s352 = scalar_select %p351, %s21, 0
        %s353 = sadd.s32 %s352, %s350
        %s354 = smul.addr %s353, 8
        %s355 = scalar_lea.vmem %s4, %s354
      $region48: #{tpu_custom_call.1} parent=43 // pred_fallthru
        _
    $region44: #{tpu_custom_call.1} parent=5 // pred_fallthru
      _
  $region6: #{tpu_custom_call.1} parent=0 // loop_footer
    %s14 = sadd.s32 1, %s10
  $region7: #{tpu_custom_call.1} parent=0 // loop_footer_branch
    %9 = sbr.rel target = $region3
  $region8: #{tpu_custom_call.1} parent=0 // loop_exit
    _

</llo_original>
